<compile_context>
chip_gen: v7x
topology: tpu7x:2x2x1
jax: 0.10.0
libtpu: 0.0.40
codegen_flags: <defaults>
</compile_context>

<pallas_src>
import functools
import math

import jax
import jax.numpy as jnp
import numpy as np
from jax.experimental import pallas as pl
from jax.experimental.pallas import tpu as pltpu

_PAD = 6                      # hardcoded padding=6 in the PyTorch AvgPool1d
_VMEM_BUDGET = 12 * 1024 * 1024
_VMEM_LIMIT = 32 * 1024 * 1024


def _round_up(a, b):
    return ((a + b - 1) // b) * b


def _cdiv(a, b):
    return -(-a // b)


# --------------------------------------------------------------------------
# Kernels: one MXU matmul + bias add, lane-dense loads/stores on both paths.
# --------------------------------------------------------------------------

def _rows_kernel(x_ref, w_ref, b_ref, o_ref):
    """Row-major path.  x:(TM,kL)  w:(kL,kF)  b:(1,kF)  o:(TM,kF)."""
    o_ref[...] = (
        jnp.dot(x_ref[...], w_ref[...], preferred_element_type=jnp.float32)
        + b_ref[...]
    ).astype(o_ref.dtype)


def _cmajor_kernel(x_ref, w_ref, b_ref, o_ref):
    """Channel-major path.  x:(L,TC)  w:(F,L)  b:(F,1)  o:(F,TC)."""
    o_ref[...] = (
        jnp.dot(w_ref[...], x_ref[...], preferred_element_type=jnp.float32)
        + b_ref[...]
    ).astype(o_ref.dtype)


# --------------------------------------------------------------------------
# Parameter folding (hoisted out of the per-call path).
# --------------------------------------------------------------------------

def make_dlinear_params(w_trend, b_trend, w_seasonal, b_seasonal, *,
                        kernel_size, compute_dtype=jnp.bfloat16):
    """Fold moving-average + both Linears into one weight/bias, pre-pack both layouts.

    w_*: (F, L) ; b_*: (F,).  Returns a dict consumed by dlinear_forward().
    """
    F, L = w_trend.shape
    # The module's padding=6 + drop-first pooling only shape-checks (x - mean)
    # when kernel_size == 2 * padding == 12.
    assert kernel_size == 2 * _PAD, "LTSF_DLinear requires kernel_size == 12"

    # mean = x @ A  with A[t, s] = 1/K iff (s - t) in [PAD - K, PAD - 1]
    offs = np.arange(L)[None, :] - np.arange(L)[:, None]
    band = (offs >= _PAD - kernel_size) & (offs <= _PAD - 1)
    A = jnp.asarray(band, jnp.float32) / float(kernel_size)          # (L, L)
    wt_t = w_trend.T.astype(jnp.float32)                             # (L, F)
    ws_t = w_seasonal.T.astype(jnp.float32)                          # (L, F)
    w_eff = ws_t + A @ (wt_t - ws_t)                                 # (L, F)
    b_sum = (b_trend + b_seasonal).astype(jnp.float32)               # (F,)

    # ---- row-major (small-C) path: lane-dense packing or F padding ----
    itemsize = jnp.dtype(compute_dtype).itemsize
    g = math.gcd(F, 128)
    k = 128 // g
    if k > 1:
        packed_bytes = (k * L) * (k * F) * itemsize
        if k > 8 or packed_bytes > (2 << 20):
            k = 1  # big F: padding F is cheaper than a huge 1/k-utilized weight
    if k > 1:                                   # k*F = lcm(F,128) -> lane-dense
        Fp = F
        w_rows = jnp.kron(jnp.eye(k, dtype=jnp.float32), w_eff)      # (kL, kF)
        b_rows = jnp.tile(b_sum, k).reshape(1, k * Fp)
    else:                                       # pad F up to the lane width
        Fp = _round_up(F, 128)
        w_rows = jnp.pad(w_eff, ((0, 0), (0, Fp - F)))
        b_rows = jnp.pad(b_sum, (0, Fp - F)).reshape(1, Fp)
    w_rows = w_rows.astype(compute_dtype)

    # ---- channel-major (C >= 128) path: weight stays tiny & resident, keep f32 ----
    # (x streams in its native dtype there; casting it would add an extra HBM pass
    #  since the C-major route has no fused layout pass to piggyback on.)
    w_cmajor = w_eff.T.astype(jnp.float32)                           # (F, L)
    b_cmajor = b_sum.reshape(F, 1)

    return dict(w_rows=w_rows, b_rows=b_rows, w_cmajor=w_cmajor, b_cmajor=b_cmajor,
                k=k, F=F, Fp=Fp)


# --------------------------------------------------------------------------
# Forward paths.
# --------------------------------------------------------------------------

@functools.partial(jax.jit, static_argnames=("k", "F", "Fp"))
def _forward_rows(x, w_rows, b_rows, *, k, F, Fp):
    """Small-C path: one row per (b, c), k rows packed per kernel row."""
    B, L, C = x.shape
    kL, kF = k * L, k * Fp
    cdt = w_rows.dtype
    in_b = np.dtype(cdt).itemsize

    M = B * C
    x_rowsm = jnp.transpose(x, (0, 2, 1)).reshape(M, L).astype(cdt)  # fused layout+cast
    MP = _cdiv(M, k)
    if MP * k != M:
        x_rowsm = jnp.pad(x_rowsm, ((0, MP * k - M), (0, 0)))
    x_pack = x_rowsm.reshape(MP, kL)

    # Tile sizing: amortize the ~0.35us/step cost with big tiles (VMEM budgeted,
    # cap 2048), but keep >= 4 grid steps (>= 2 per v7x TensorCore) once there is
    # enough work to pipeline; never pad a tiny input up to a huge tile.
    per_row = 2 * (kL * in_b + kF * 4)               # double-buffered in + out
    TM = min(2048, max(8, (_VMEM_BUDGET // per_row) // 8 * 8))
    TM = min(TM, _round_up(MP, 8))
    if MP >= 32:
        TM = min(TM, max(8, (MP // 4) // 8 * 8))

    G = _cdiv(MP, TM)
    MPp = G * TM
    if MPp != MP:
        x_pack = jnp.pad(x_pack, ((0, MPp - MP), (0, 0)))

    cost = pl.CostEstimate(
        flops=2 * MPp * kL * kF,
        transcendentals=0,
        bytes_accessed=MPp * kL * in_b + kL * kF * in_b + kF * 4 + MPp * kF * 4)

    out = pl.pallas_call(
        _rows_kernel,
        out_shape=jax.ShapeDtypeStruct((MPp, kF), x.dtype),
        grid=(G,),
        in_specs=[
            pl.BlockSpec((TM, kL), lambda i: (i, 0)),
            pl.BlockSpec((kL, kF), lambda i: (0, 0)),   # constant index -> resident
            pl.BlockSpec((1, kF), lambda i: (0, 0)),
        ],
        out_specs=pl.BlockSpec((TM, kF), lambda i: (i, 0)),
        compiler_params=pltpu.CompilerParams(
            dimension_semantics=("parallel",),
            vmem_limit_bytes=_VMEM_LIMIT),
        cost_estimate=cost,
    )(x_pack, w_rows, b_rows)

    out = out.reshape(MPp * k, Fp)[:M, :F].reshape(B, C, F)   # unpack, drop padding
    return jnp.transpose(out, (0, 2, 1))                      # (B, F, C)


@functools.partial(jax.jit, static_argnames=("F",))
def _forward_cmajor(x, w_t, b_col, *, F):
    """Large-C path: out[b] = W_eff^T @ x[b] straight from the (B, L, C) layout."""
    B, L, C = x.shape
    Cp128 = _round_up(C, 128)
    TC = Cp128 if Cp128 <= 2048 else 1024
    Cp = _round_up(C, TC)
    xp = jnp.pad(x, ((0, 0), (0, 0), (0, Cp - C))) if Cp != C else x
    Gc = Cp // TC

    cost = pl.CostEstimate(
        flops=2 * B * F * L * Cp,
        transcendentals=0,
        bytes_accessed=B * L * Cp * np.dtype(x.dtype).itemsize
        + F * L * 4 + F * 4 + B * F * Cp * 4)

    out = pl.pallas_call(
        _cmajor_kernel,
        out_shape=jax.ShapeDtypeStruct((B, F, Cp), x.dtype),
        grid=(B, Gc),
        in_specs=[
            pl.BlockSpec((None, L, TC), lambda b, c: (b, 0, c)),
            pl.BlockSpec((F, L), lambda b, c: (0, 0)),   # resident weight
            pl.BlockSpec((F, 1), lambda b, c: (0, 0)),
        ],
        out_specs=pl.BlockSpec((None, F, TC), lambda b, c: (b, 0, c)),
        compiler_params=pltpu.CompilerParams(
            dimension_semantics=("parallel", "parallel"),
            vmem_limit_bytes=_VMEM_LIMIT),
        cost_estimate=cost,
    )(xp, w_t, b_col)

    return out[..., :C] if Cp != C else out                   # (B, F, C)


def dlinear_forward(x, params):
    """x: (B, L, C) -> (B, F, C), matching LTSF_DLinear(individual=False).forward."""
    # TODO(synk): individual=True branch (per-channel Linear weights) not wired up;
    # it would stack a (C, L, F) weight and add a channel grid axis.
    _, _, C = x.shape
    if C >= 128:
        return _forward_cmajor(x, params["w_cmajor"], params["b_cmajor"],
                               F=params["F"])
    return _forward_rows(x, params["w_rows"], params["b_rows"],
                         k=params["k"], F=params["F"], Fp=params["Fp"])


# --------------------------------------------------------------------------
# Pure-JAX reference (explicit pooling + two Linears), mirrors the PyTorch forward.
# --------------------------------------------------------------------------

def dlinear_reference(x, w_trend, b_trend, w_seasonal, b_seasonal, kernel_size):
    B, L, C = x.shape
    xc = jnp.transpose(x, (0, 2, 1))                          # (B, C, L)
    xpad = jnp.pad(xc, ((0, 0), (0, 0), (_PAD, _PAD)))
    outlen = L + 2 * _PAD - kernel_size + 1
    pooled = jnp.stack(
        [xpad[..., i:i + kernel_size].mean(axis=-1) for i in range(outlen)],
        axis=-1)
    mean = pooled[..., 1:]                                    # drop first -> (B, C, L)
    seasonal = xc - mean
    trend_out = mean @ w_trend.T + b_trend
    seasonal_out = seasonal @ w_seasonal.T + b_seasonal
    return jnp.transpose(trend_out + seasonal_out, (0, 2, 1))


if __name__ == "__main__":
    kernel_size = 12              # required by the module's hardcoded padding=6
    key = jax.random.PRNGKey(0)

    def init_linears(k, window, forecast):
        kwt, kbt, kws, kbs = jax.random.split(k, 4)
        bound = 1.0 / np.sqrt(window)
        w_t = jax.random.uniform(kwt, (forecast, window), jnp.float32, -bound, bound)
        b_t = jax.random.uniform(kbt, (forecast,), jnp.float32, -bound, bound)
        w_s = jax.random.uniform(kws, (forecast, window), jnp.float32, -bound, bound)
        b_s = jax.random.uniform(kbs, (forecast,), jnp.float32, -bound, bound)
        return w_t, b_t, w_s, b_s

    # ---- Test 1: small channel count -> row-packed path (bf16 + strict f32) ----
    B, C, window_size, forcast_size = 2, 4, 32, 16
    kx, kp, key = jax.random.split(key, 3)
    x = jax.random.normal(kx, (B, window_size, C), dtype=jnp.float32)
    w_t, b_t, w_s, b_s = init_linears(kp, window_size, forcast_size)
    ref = dlinear_reference(x, w_t, b_t, w_s, b_s, kernel_size)

    params_bf16 = make_dlinear_params(w_t, b_t, w_s, b_s, kernel_size=kernel_size,
                                      compute_dtype=jnp.bfloat16)
    out = jax.block_until_ready(dlinear_forward(x, params_bf16))
    assert out.shape == (B, forcast_size, C)
    np.testing.assert_allclose(np.asarray(out), np.asarray(ref), rtol=5e-2, atol=5e-2)

    params_f32 = make_dlinear_params(w_t, b_t, w_s, b_s, kernel_size=kernel_size,
                                     compute_dtype=jnp.float32)
    out32 = jax.block_until_ready(dlinear_forward(x, params_f32))
    np.testing.assert_allclose(np.asarray(out32), np.asarray(ref), rtol=1e-4, atol=1e-5)

    # ---- Test 2: many channels -> C-major path (no wrapper transposes, C padded) ----
    B2, C2 = 2, 200
    kx2, kp2, key = jax.random.split(key, 3)
    x2 = jax.random.normal(kx2, (B2, window_size, C2), dtype=jnp.float32)
    w_t2, b_t2, w_s2, b_s2 = init_linears(kp2, window_size, forcast_size)
    params2 = make_dlinear_params(w_t2, b_t2, w_s2, b_s2, kernel_size=kernel_size,
                                  compute_dtype=jnp.float32)
    out2 = jax.block_until_ready(dlinear_forward(x2, params2))
    ref2 = dlinear_reference(x2, w_t2, b_t2, w_s2, b_s2, kernel_size)
    assert out2.shape == (B2, forcast_size, C2)
    np.testing.assert_allclose(np.asarray(out2), np.asarray(ref2), rtol=1e-3, atol=1e-4)

    print("KERNEL_OK")
</pallas_src>

<mosaic_0001>
module attributes {stable_mosaic.version = 11 : i64} {
  func.func @_rows_kernel(%arg0: i32, %arg1: memref<8x256xbf16, #tpu.memory_space<vmem>>, %arg2: memref<256x128xbf16, #tpu.memory_space<vmem>>, %arg3: memref<1x128xf32, #tpu.memory_space<vmem>>, %arg4: memref<8x128xf32, #tpu.memory_space<vmem>>) attributes {dimension_semantics = [#tpu.dimension_semantics<parallel>], iteration_bounds = array<i64: 1>, scalar_prefetch = 0 : i64, scratch_operands = 0 : i64, tpu.core_type = #tpu.core_type<tc>, window_params = [{transform_indices = @transform_0, window_bounds = array<i64: 8, 256>}, {pipeline_mode = #tpu.pipeline_mode<synchronous>, transform_indices = @transform_1, window_bounds = array<i64: 256, 128>}, {pipeline_mode = #tpu.pipeline_mode<synchronous>, transform_indices = @transform_2, window_bounds = array<i64: 1, 128>}, {transform_indices = @transform_3, window_bounds = array<i64: 8, 128>}]} {
    %c0 = arith.constant 0 : index
    %c0_0 = arith.constant 0 : index
    %0 = vector.load %arg1[%c0, %c0_0] : memref<8x256xbf16, #tpu.memory_space<vmem>>, vector<8x256xbf16>
    %c0_1 = arith.constant 0 : index
    %c0_2 = arith.constant 0 : index
    %1 = vector.load %arg2[%c0_1, %c0_2] : memref<256x128xbf16, #tpu.memory_space<vmem>>, vector<256x128xbf16>
    %cst = arith.constant dense<0.000000e+00> : vector<8x128xf32>
    %2 = tpu.matmul %0, %1, %cst {dimension_numbers = #tpu.dot_dimension_numbers<[1], [0], [0], [1], [0, 0, 1, 1], [], []>} : vector<8x256xbf16>, vector<256x128xbf16>, vector<8x128xf32> -> vector<8x128xf32>
    %c0_3 = arith.constant 0 : index
    %c0_4 = arith.constant 0 : index
    %3 = vector.load %arg3[%c0_3, %c0_4] : memref<1x128xf32, #tpu.memory_space<vmem>>, vector<1x128xf32>
    %4 = vector.broadcast %3 : vector<1x128xf32> to vector<8x128xf32>
    %5 = arith.addf %2, %4 : vector<8x128xf32>
    %c0_5 = arith.constant 0 : index
    %c0_6 = arith.constant 0 : index
    %6 = vector.load %arg4[%c0_5, %c0_6] : memref<8x128xf32, #tpu.memory_space<vmem>>, vector<8x128xf32>
    tpu.vector_store %arg4[%c0_5, %c0_6], %5 {strides = array<i32>} : memref<8x128xf32, #tpu.memory_space<vmem>>, vector<8x128xf32>,
    return
  }
  func.func @transform_0(%arg0: i32) -> (i32, i32) {
    %c0_i32 = arith.constant 0 : i32
    %c0_i32_0 = arith.constant 0 : i32
    return %arg0, %c0_i32 : i32, i32
  }
  func.func @transform_1(%arg0: i32) -> (i32, i32) {
    %c0_i32 = arith.constant 0 : i32
    %c0_i32_0 = arith.constant 0 : i32
    %c0_i32_1 = arith.constant 0 : i32
    return %c0_i32, %c0_i32_0 : i32, i32
  }
  func.func @transform_2(%arg0: i32) -> (i32, i32) {
    %c0_i32 = arith.constant 0 : i32
    %c0_i32_0 = arith.constant 0 : i32
    %c0_i32_1 = arith.constant 0 : i32
    return %c0_i32, %c0_i32_0 : i32, i32
  }
  func.func @transform_3(%arg0: i32) -> (i32, i32) {
    %c0_i32 = arith.constant 0 : i32
    %c0_i32_0 = arith.constant 0 : i32
    return %arg0, %c0_i32 : i32, i32
  }
}

</mosaic_0001>

<llo_original>
// kernel: _forward_rows.1
$region0: #{_forward_rows.1}
  #allocation0 [shape = 'u32[]', space=smem, size = 0x4, offset = 0x4, fixed_abs, tag = 'smem constant byte address 0x4 - core index']
  #allocation1 [shape = 'u32[144,128]{1,0:T(1,128)}', space=vmem, size = 0x12000, scoped, tag = 'internal scratch']
  %s0 = inlined_call_operand.vmem [shape: bf16[8,256], index: 0, kind: input, shape index: {}]
  %s1 = inlined_call_operand.hbm [shape: bf16[256,128], index: 1, kind: input, shape index: {}]
  %s2 = inlined_call_operand.vmem [shape: f32[1,128], index: 2, kind: input, shape index: {}]
  %s3 = inlined_call_operand.vmem [shape: f32[8,128], index: 3, kind: output, shape index: {}]
  %s4 = sld [smem:[#allocation0]]
  $region26: #{_forward_rows.1} parent=0
    _
  %s6 = ssub.s32 1, %s4
  %s7 = scalar_select 0, %s6, %s4
  $region1: #{_forward_rows.1} parent=0
    #allocation2 [shape = 'u8[65536]{0}', space=vmem, size = 0x10000, scoped, tag = 'input window, operand 1, single buffered']
    #allocation3 [shape = 's32[1]{0}', space=sflag, size = 0x4, scoped, tag = 'scoped memory for _forward_rows.1']
    %8 = vsyncpa [#allocation3], 0
    // Predicated region
    $region2: #{_forward_rows.1} parent=1 // pred_check
      _
    $region3: #{_forward_rows.1} parent=1 // pred_check_branch
      %10 = sbr.rel (0) target = $region5
    $region4: #{_forward_rows.1} parent=1 // pred_region
      _
    $region5: #{_forward_rows.1} parent=1 // pred_fallthru
      _
    // Predicated region
    $region6: #{_forward_rows.1} parent=1 // pred_check
      _
    $region7: #{_forward_rows.1} parent=1 // pred_check_branch
      %12 = sbr.rel (0) target = $region9
    $region8: #{_forward_rows.1} parent=1 // pred_region
      %s14 = ssub.s32 2048, 2048
      %15 = vsyncadd [#allocation3], %s14
      %s16 = sshll.u32 [#allocation2], 4
      %s17 = int_to_ptr.vmem [resolvable:$true] %s16
      %22 = dma.hbm_to_vmem [thread:$0]  %s1, 2048, %s17, [#allocation3], 64, 64, 4
    $region9: #{_forward_rows.1} parent=1 // pred_fallthru
      _
    // Predicated region
    $region10: #{_forward_rows.1} parent=1 // pred_check
      _
    $region11: #{_forward_rows.1} parent=1 // pred_check_branch
      %24 = sbr.rel (0) target = $region13
    $region12: #{_forward_rows.1} parent=1 // pred_region
      _
    $region13: #{_forward_rows.1} parent=1 // pred_fallthru
      _
    // Predicated region
    $region14: #{_forward_rows.1} parent=1 // pred_check
      _
    $region15: #{_forward_rows.1} parent=1 // pred_check_branch
      %26 = sbr.rel (0) target = $region17
    $region16: #{_forward_rows.1} parent=1 // pred_region
      %27 = dma.done [#allocation3], 2048
    $region17: #{_forward_rows.1} parent=1 // pred_fallthru
      _
    %v29 = vld [vmem:[%s0] sm:$0xff]
    %v30 = vld [vmem:[#allocation2] sm:$0xf]
    %v31 = vld [vmem:[#allocation2 + $0x4] sm:$0xf]
    %v32 = vld [vmem:[#allocation2 + $0x8] sm:$0xf]
    %v33 = vld [vmem:[#allocation2 + $0xc] sm:$0xf]
    %v34 = vld [vmem:[#allocation2 + $0x10] sm:$0xf]
    %v35 = vld [vmem:[#allocation2 + $0x14] sm:$0xf]
    %v36 = vld [vmem:[#allocation2 + $0x18] sm:$0xf]
    %v37 = vld [vmem:[#allocation2 + $0x1c] sm:$0xf]
    %v38 = vld [vmem:[#allocation2 + $0x20] sm:$0xf]
    %v39 = vld [vmem:[#allocation2 + $0x24] sm:$0xf]
    %v40 = vld [vmem:[#allocation2 + $0x28] sm:$0xf]
    %v41 = vld [vmem:[#allocation2 + $0x2c] sm:$0xf]
    %v42 = vld [vmem:[#allocation2 + $0x30] sm:$0xf]
    %v43 = vld [vmem:[#allocation2 + $0x34] sm:$0xf]
    %v44 = vld [vmem:[#allocation2 + $0x38] sm:$0xf]
    %v45 = vld [vmem:[#allocation2 + $0x3c] sm:$0xf]
    %v46 = vld [vmem:[#allocation2 + $0x40] sm:$0xf]
    %v47 = vld [vmem:[#allocation2 + $0x44] sm:$0xf]
    %v48 = vld [vmem:[#allocation2 + $0x48] sm:$0xf]
    %v49 = vld [vmem:[#allocation2 + $0x4c] sm:$0xf]
    %v50 = vld [vmem:[#allocation2 + $0x50] sm:$0xf]
    %v51 = vld [vmem:[#allocation2 + $0x54] sm:$0xf]
    %v52 = vld [vmem:[#allocation2 + $0x58] sm:$0xf]
    %v53 = vld [vmem:[#allocation2 + $0x5c] sm:$0xf]
    %v54 = vld [vmem:[#allocation2 + $0x60] sm:$0xf]
    %v55 = vld [vmem:[#allocation2 + $0x64] sm:$0xf]
    %v56 = vld [vmem:[#allocation2 + $0x68] sm:$0xf]
    %v57 = vld [vmem:[#allocation2 + $0x6c] sm:$0xf]
    %v58 = vld [vmem:[#allocation2 + $0x70] sm:$0xf]
    %v59 = vld [vmem:[#allocation2 + $0x74] sm:$0xf]
    %v60 = vld [vmem:[#allocation2 + $0x78] sm:$0xf]
    %v61 = vld [vmem:[#allocation2 + $0x7c] sm:$0xf]
    %v62 = vld [vmem:[%s2] sm:$0x1]
    %v64 = vlaneseq
    %v65 = vshrl.u32 %v64, 7
    %v66 = vsub.s32 0, %v65
    %v67 = vrot.slane %v62, %v66
    %v70 = vunpack.c.l.b16 %v29
    %v71 = vunpack.c.h.b16 %v29
    %v72 = vpack.c.b16 %v70, %v70
    %v73 = vpack.c.b16 %v71, %v71
    %v108 = vunpack.c.l.b16 %v30
    %v109 = vunpack.c.l.b16 %v31
    %v110 = vunpack.c.l.b16 %v32
    %v111 = vunpack.c.l.b16 %v33
    %v112 = vunpack.c.l.b16 %v34
    %v113 = vunpack.c.l.b16 %v35
    %v114 = vunpack.c.l.b16 %v36
    %v115 = vunpack.c.l.b16 %v37
    %v116 = vunpack.c.l.b16 %v38
    %v117 = vunpack.c.l.b16 %v39
    %v118 = vunpack.c.l.b16 %v40
    %v119 = vunpack.c.l.b16 %v41
    %v120 = vunpack.c.l.b16 %v42
    %v121 = vunpack.c.l.b16 %v43
    %v122 = vunpack.c.l.b16 %v44
    %v123 = vunpack.c.l.b16 %v45
    %v124 = vunpack.c.l.b16 %v46
    %v125 = vunpack.c.l.b16 %v47
    %v126 = vunpack.c.l.b16 %v48
    %v127 = vunpack.c.l.b16 %v49
    %v128 = vunpack.c.l.b16 %v50
    %v129 = vunpack.c.l.b16 %v51
    %v130 = vunpack.c.l.b16 %v52
    %v131 = vunpack.c.l.b16 %v53
    %v132 = vunpack.c.l.b16 %v54
    %v133 = vunpack.c.l.b16 %v55
    %v134 = vunpack.c.l.b16 %v56
    %v135 = vunpack.c.l.b16 %v57
    %v136 = vunpack.c.l.b16 %v58
    %v137 = vunpack.c.l.b16 %v59
    %v138 = vunpack.c.l.b16 %v60
    %v139 = vunpack.c.l.b16 %v61
    %v140 = vpack.c.b16 %v109, %v108
    %v141 = vpack.c.b16 %v111, %v110
    %v142 = vpack.c.b16 %v113, %v112
    %v143 = vpack.c.b16 %v115, %v114
    %v144 = vpack.c.b16 %v117, %v116
    %v145 = vpack.c.b16 %v119, %v118
    %v146 = vpack.c.b16 %v121, %v120
    %v147 = vpack.c.b16 %v123, %v122
    %v148 = vpack.c.b16 %v125, %v124
    %v149 = vpack.c.b16 %v127, %v126
    %v150 = vpack.c.b16 %v129, %v128
    %v151 = vpack.c.b16 %v131, %v130
    %v152 = vpack.c.b16 %v133, %v132
    %v153 = vpack.c.b16 %v135, %v134
    %v154 = vpack.c.b16 %v137, %v136
    %v155 = vpack.c.b16 %v139, %v138
    %172 = vmatprep.subr.bf16.mxu0 0
    %173 = vmatpush1.bf16.msra.mxu0 %v140
    %174 = vmatprep.subr.bf16.mxu0 0
    %175 = vmatpush1.bf16.msra.mxu0 %v141
    %176 = vmatprep.subr.bf16.mxu0 0
    %177 = vmatpush1.bf16.msra.mxu0 %v142
    %178 = vmatprep.subr.bf16.mxu0 0
    %179 = vmatpush1.bf16.msra.mxu0 %v143
    %180 = vmatprep.subr.bf16.mxu0 0
    %181 = vmatpush1.bf16.msra.mxu0 %v144
    %182 = vmatprep.subr.bf16.mxu0 0
    %183 = vmatpush1.bf16.msra.mxu0 %v145
    %184 = vmatprep.subr.bf16.mxu0 0
    %185 = vmatpush1.bf16.msra.mxu0 %v146
    %186 = vmatprep.subr.bf16.mxu0 0
    %187 = vmatpush1.bf16.msra.mxu0 %v147
    %188 = vmatprep.subr.bf16.mxu0 0
    %189 = vmatpush1.bf16.msra.mxu0 %v148
    %190 = vmatprep.subr.bf16.mxu0 0
    %191 = vmatpush1.bf16.msra.mxu0 %v149
    %192 = vmatprep.subr.bf16.mxu0 0
    %193 = vmatpush1.bf16.msra.mxu0 %v150
    %194 = vmatprep.subr.bf16.mxu0 0
    %195 = vmatpush1.bf16.msra.mxu0 %v151
    %196 = vmatprep.subr.bf16.mxu0 0
    %197 = vmatpush1.bf16.msra.mxu0 %v152
    %198 = vmatprep.subr.bf16.mxu0 0
    %199 = vmatpush1.bf16.msra.mxu0 %v153
    %200 = vmatprep.subr.bf16.mxu0 0
    %201 = vmatpush1.bf16.msra.mxu0 %v154
    %202 = vmatprep.subr.bf16.mxu0 0
    %203 = vmatpush1.bf16.msra.mxu0 %v155
    %204 = vmatprep.mubr.bf16.mxu0 %v73
    %205 = vmatmul.mubr.bf16.gmra.mrb[0].mxu0 %v72
    %v206 = vpop.f32.mrb[0].mxu0
    %v207 = vadd.f32 %v67, %v206
    %v208 = vpop.f32.mrb[0].mxu0
    %v209 = vpop.f32.mrb[0].mxu0
    %v210 = vpop.f32.mrb[0].mxu0
    %211 = vdwg.mxu0
    %212 = vst [vmem:[%s3] sm:$0xff] %v207
    // Predicated region
    $region18: #{_forward_rows.1} parent=1 // pred_check
      _
    $region19: #{_forward_rows.1} parent=1 // pred_check_branch
      %214 = sbr.rel (0) target = $region21
    $region20: #{_forward_rows.1} parent=1 // pred_region
      _
    $region21: #{_forward_rows.1} parent=1 // pred_fallthru
      _
    // Predicated region
    $region22: #{_forward_rows.1} parent=1 // pred_check
      _
    $region23: #{_forward_rows.1} parent=1 // pred_check_branch
      %216 = sbr.rel (0) target = $region25
    $region24: #{_forward_rows.1} parent=1 // pred_region
      _
    $region25: #{_forward_rows.1} parent=1 // pred_fallthru
      _
    %217 = vsyncpa [#allocation3], 1

</llo_original>
